<compile_context>
chip_gen: v7x
topology: tpu7x:2x2x1
jax: 0.10.0
libtpu: 0.0.40
codegen_flags: <defaults>
</compile_context>

<pallas_src>
import functools
import math

import jax
import jax.numpy as jnp
from jax.experimental import pallas as pl
from jax.experimental.pallas import tpu as pltpu


_VMEM_LIMIT = 64 * 1024 * 1024  # scoped-VMEM cap; fits all chips, sized for v7x


# ---------------------------------------------------------------------------
# tile pickers
# ---------------------------------------------------------------------------
def _row_tile(n: int) -> int:
    """Sublane-aligned row tile (second-to-last block dim)."""
    if n <= 256:
        return n
    for t in (256, 128, 64, 32, 16, 8):
        if n % t == 0:
            return t
    return n


def _col_tile(n: int) -> int:
    """Lane-aligned output-column tile (last block dim)."""
    if n <= 512:
        return n
    for t in (512, 384, 256, 128):
        if n % t == 0:
            return t
    return n


def _seq_tile(n: int) -> int:
    if n <= 128:
        return n
    for t in (256, 128):
        if n % t == 0:
            return t
    return n


# ---------------------------------------------------------------------------
# LayerNorm (standalone — only used for the final ln_f)
# ---------------------------------------------------------------------------
def _layernorm_kernel(x_ref, g_ref, b_ref, o_ref, *, eps):
    x = x_ref[...].astype(jnp.float32)
    mean = jnp.mean(x, axis=-1, keepdims=True)
    xc = x - mean
    var = jnp.mean(xc * xc, axis=-1, keepdims=True)
    y = xc * jax.lax.rsqrt(var + eps)
    y = y * g_ref[...].astype(jnp.float32) + b_ref[...].astype(jnp.float32)
    o_ref[...] = y.astype(o_ref.dtype)


def layernorm(x, gamma, beta, *, eps):
    S, E = x.shape
    tm = _row_tile(S)
    return pl.pallas_call(
        functools.partial(_layernorm_kernel, eps=eps),
        out_shape=jax.ShapeDtypeStruct((S, E), x.dtype),
        grid=(S // tm,),
        in_specs=[
            pl.BlockSpec((tm, E), lambda i: (i, 0)),
            pl.BlockSpec((1, E), lambda i: (0, 0)),
            pl.BlockSpec((1, E), lambda i: (0, 0)),
        ],
        out_specs=pl.BlockSpec((tm, E), lambda i: (i, 0)),
        compiler_params=pltpu.CompilerParams(
            dimension_semantics=("parallel",), vmem_limit_bytes=_VMEM_LIMIT),
    )(x, gamma.reshape(1, -1), beta.reshape(1, -1))


# ---------------------------------------------------------------------------
# Fused LayerNorm + Linear (x -> LN(x) @ W + b), optional fused GELU
# ---------------------------------------------------------------------------
def _ln_linear_kernel(x_ref, g_ref, bln_ref, w_ref, b_ref, o_ref, *,
                      eps, activation):
    x = x_ref[...].astype(jnp.float32)
    mean = jnp.mean(x, axis=-1, keepdims=True)
    xc = x - mean
    var = jnp.mean(xc * xc, axis=-1, keepdims=True)
    xn = xc * jax.lax.rsqrt(var + eps)
    xn = xn * g_ref[...].astype(jnp.float32) + bln_ref[...].astype(jnp.float32)
    acc = jnp.dot(xn.astype(w_ref.dtype), w_ref[...],
                  preferred_element_type=jnp.float32)
    acc = acc + b_ref[...].astype(jnp.float32)
    if activation == "gelu":
        acc = jax.nn.gelu(acc, approximate=True)
    o_ref[...] = acc.astype(o_ref.dtype)


def ln_linear(x, gamma, beta, w, b, *, eps, activation=None):
    """LN(x):[M,K] @ w:[K,N] + b:[N], optional fused GELU."""
    M, K = x.shape
    Kw, N = w.shape
    assert K == Kw
    tm, tn = _row_tile(M), _col_tile(N)
    grid = (M // tm, N // tn)
    return pl.pallas_call(
        functools.partial(_ln_linear_kernel, eps=eps, activation=activation),
        out_shape=jax.ShapeDtypeStruct((M, N), x.dtype),
        grid=grid,
        in_specs=[
            pl.BlockSpec((tm, K), lambda i, j: (i, 0)),   # x (full row for LN)
            pl.BlockSpec((1, K), lambda i, j: (0, 0)),    # ln gamma
            pl.BlockSpec((1, K), lambda i, j: (0, 0)),    # ln beta
            pl.BlockSpec((K, tn), lambda i, j: (0, j)),   # W
            pl.BlockSpec((1, tn), lambda i, j: (0, j)),   # b
        ],
        out_specs=pl.BlockSpec((tm, tn), lambda i, j: (i, j)),
        compiler_params=pltpu.CompilerParams(
            dimension_semantics=("parallel", "parallel"),
            vmem_limit_bytes=_VMEM_LIMIT),
    )(x, gamma.reshape(1, -1), beta.reshape(1, -1), w, b.reshape(1, -1))


# ---------------------------------------------------------------------------
# Linear (x @ W + b), optional fused GELU or fused residual add
# ---------------------------------------------------------------------------
def _linear_kernel(x_ref, w_ref, b_ref, o_ref, *, activation):
    acc = jnp.dot(x_ref[...], w_ref[...], preferred_element_type=jnp.float32)
    acc = acc + b_ref[...].astype(jnp.float32)
    if activation == "gelu":
        acc = jax.nn.gelu(acc, approximate=True)
    o_ref[...] = acc.astype(o_ref.dtype)


def _linear_residual_kernel(x_ref, w_ref, b_ref, r_ref, o_ref):
    acc = jnp.dot(x_ref[...], w_ref[...], preferred_element_type=jnp.float32)
    acc = acc + b_ref[...].astype(jnp.float32) + r_ref[...].astype(jnp.float32)
    o_ref[...] = acc.astype(o_ref.dtype)


def linear(x, w, b, *, activation=None, residual=None):
    """x:[M,K] @ w:[K,N] + b:[N]  (optionally fused GELU or fused residual add)."""
    M, K = x.shape
    Kw, N = w.shape
    assert K == Kw
    tm, tn = _row_tile(M), _col_tile(N)
    grid = (M // tm, N // tn)
    x_spec = pl.BlockSpec((tm, K), lambda i, j: (i, 0))
    w_spec = pl.BlockSpec((K, tn), lambda i, j: (0, j))
    b_spec = pl.BlockSpec((1, tn), lambda i, j: (0, j))
    o_spec = pl.BlockSpec((tm, tn), lambda i, j: (i, j))
    cparams = pltpu.CompilerParams(
        dimension_semantics=("parallel", "parallel"), vmem_limit_bytes=_VMEM_LIMIT)
    if residual is None:
        return pl.pallas_call(
            functools.partial(_linear_kernel, activation=activation),
            out_shape=jax.ShapeDtypeStruct((M, N), x.dtype),
            grid=grid,
            in_specs=[x_spec, w_spec, b_spec],
            out_specs=o_spec,
            compiler_params=cparams,
        )(x, w, b.reshape(1, -1))
    assert activation is None
    r_spec = pl.BlockSpec((tm, tn), lambda i, j: (i, j))
    return pl.pallas_call(
        _linear_residual_kernel,
        out_shape=jax.ShapeDtypeStruct((M, N), x.dtype),
        grid=grid,
        in_specs=[x_spec, w_spec, b_spec, r_spec],
        out_specs=o_spec,
        compiler_params=cparams,
    )(x, w, b.reshape(1, -1), residual)


# ---------------------------------------------------------------------------
# Multi-head causal attention (flash-style) with fused output projection,
# output bias and residual add.
# ---------------------------------------------------------------------------
def _mha_kernel(q_ref, k_ref, v_ref, wout_ref, bout_ref, resid_ref, o_ref,
                m_sc, l_sc, acc_sc, oacc_sc, *, tq, tk, scale):
    i = pl.program_id(0)    # q tile
    h = pl.program_id(1)    # head
    kv = pl.program_id(2)   # kv tile
    n_head = pl.num_programs(1)
    n_kv = pl.num_programs(2)

    @pl.when(jnp.logical_and(h == 0, kv == 0))
    def _init_out_acc():
        # cross-head output-projection accumulator; out-proj bias added exactly once
        oacc_sc[...] = jnp.broadcast_to(
            bout_ref[...].astype(jnp.float32), oacc_sc.shape)

    @pl.when(kv == 0)
    def _init_softmax_state():
        m_sc[...] = jnp.full_like(m_sc, -jnp.inf)
        l_sc[...] = jnp.zeros_like(l_sc)
        acc_sc[...] = jnp.zeros_like(acc_sc)

    q_start = i * tq
    kv_start = kv * tk

    # Skip kv tiles entirely above the causal diagonal (saves ~half the
    # QK^T matmuls + all softmax work for those tiles).
    @pl.when(kv_start <= q_start + (tq - 1))
    def _online_softmax_step():
        q = q_ref[0]          # (tq, dim), native dtype (bf16 stays bf16)
        k = k_ref[0]          # (tk, dim)
        v = v_ref[0]          # (tk, dim)
        qs = q * jnp.asarray(scale, dtype=q.dtype)      # fold 1/sqrt(d) into q
        # contract last dims of both operands -> no materialized k.T
        s = jax.lax.dot_general(qs, k, (((1,), (1,)), ((), ())),
                                preferred_element_type=jnp.float32)  # (tq, tk)
        rows = q_start + jax.lax.broadcasted_iota(jnp.int32, (tq, tk), 0)
        cols = kv_start + jax.lax.broadcasted_iota(jnp.int32, (tq, tk), 1)
        s = jnp.where(cols <= rows, s, -1e30)

        m_prev = m_sc[...]
        m_new = jnp.maximum(m_prev, jnp.max(s, axis=-1, keepdims=True))
        alpha = jnp.exp(m_prev - m_new)
        p = jnp.exp(s - m_new)
        l_sc[...] = alpha * l_sc[...] + jnp.sum(p, axis=-1, keepdims=True)
        acc_sc[...] = alpha * acc_sc[...] + jnp.dot(
            p.astype(v.dtype), v, preferred_element_type=jnp.float32)
        m_sc[...] = m_new

    @pl.when(kv == n_kv - 1)
    def _fold_head_into_output():
        # deferred softmax normalization on the (tq, head_dim) context
        ctx = acc_sc[...] * pl.reciprocal(l_sc[...], approx=False)
        # per-head slice of the output projection -> no concatenate of heads
        oacc_sc[...] += jnp.dot(ctx.astype(wout_ref.dtype), wout_ref[...],
                                preferred_element_type=jnp.float32)

    @pl.when(jnp.logical_and(h == n_head - 1, kv == n_kv - 1))
    def _write_output():
        o_ref[...] = (oacc_sc[...] + resid_ref[...].astype(jnp.float32)
                      ).astype(o_ref.dtype)


def multi_head_attention(qkv, w_out, b_out, resid, *, n_head):
    """qkv:[S,3E] (module's Q|K|V head-major layout), w_out:[E,E], b_out:[E],
    resid:[S,E] -> resid + out_proj(causal_mha(qkv))."""
    S, three_e = qkv.shape
    E = three_e // 3
    dim = E // n_head
    # Split fused qkv into per-head [H, S, dim] slabs (wrapper-side layout
    # plumbing keeps the kernel blocks lane-dense).
    q = qkv[:, 0 * E:1 * E].reshape(S, n_head, dim).transpose(1, 0, 2)
    k = qkv[:, 1 * E:2 * E].reshape(S, n_head, dim).transpose(1, 0, 2)
    v = qkv[:, 2 * E:3 * E].reshape(S, n_head, dim).transpose(1, 0, 2)

    tq = _seq_tile(S)
    tk = _seq_tile(S)
    grid = (S // tq, n_head, S // tk)
    kernel = functools.partial(_mha_kernel, tq=tq, tk=tk,
                               scale=1.0 / math.sqrt(dim))
    return pl.pallas_call(
        kernel,
        out_shape=jax.ShapeDtypeStruct((S, E), resid.dtype),
        grid=grid,
        in_specs=[
            pl.BlockSpec((1, tq, dim), lambda i, h, kv: (h, i, 0)),    # q
            pl.BlockSpec((1, tk, dim), lambda i, h, kv: (h, kv, 0)),   # k
            pl.BlockSpec((1, tk, dim), lambda i, h, kv: (h, kv, 0)),   # v
            pl.BlockSpec((dim, E), lambda i, h, kv: (h, 0)),           # w_out rows of head h
            pl.BlockSpec((1, E), lambda i, h, kv: (0, 0)),             # b_out
            pl.BlockSpec((tq, E), lambda i, h, kv: (i, 0)),            # residual
        ],
        out_specs=pl.BlockSpec((tq, E), lambda i, h, kv: (i, 0)),
        scratch_shapes=[
            pltpu.VMEM((tq, 1), jnp.float32),    # running max
            pltpu.VMEM((tq, 1), jnp.float32),    # running denom
            pltpu.VMEM((tq, dim), jnp.float32),  # per-head p @ v accumulator
            pltpu.VMEM((tq, E), jnp.float32),    # cross-head out-proj accumulator
        ],
        compiler_params=pltpu.CompilerParams(
            dimension_semantics=("parallel", "arbitrary", "arbitrary"),
            vmem_limit_bytes=_VMEM_LIMIT),
    )(q, k, v, w_out, b_out.reshape(1, -1), resid)


# ---------------------------------------------------------------------------
# GPT-2 block / model forward
# ---------------------------------------------------------------------------
def gpt2_block(x, lp, *, n_head, eps):
    # LN1 fused into the qkv projection; LN2 fused into the MLP up-projection.
    qkv = ln_linear(x, lp["ln1_g"], lp["ln1_b"], lp["w_qkv"], lp["b_qkv"], eps=eps)
    x = multi_head_attention(qkv, lp["w_out"], lp["b_out"], x, n_head=n_head)
    up = ln_linear(x, lp["ln2_g"], lp["ln2_b"], lp["w_up"], lp["b_up"],
                   eps=eps, activation="gelu")
    x = linear(up, lp["w_down"], lp["b_down"], residual=x)
    return x


def gpt2_forward(input_ids, params, *, n_head, eps):
    # TODO(synk): embedding-table row gather is data-dependent; left to XLA
    # (a PrefetchScalarGridSpec + pl.Element gather kernel adds nothing here).
    S = input_ids.shape[0]
    x = params["wte"][input_ids] + params["wpe"][jnp.arange(S)]
    layers_output = [x]
    for lp in params["layers"]:
        x = gpt2_block(x, lp, n_head=n_head, eps=eps)
        layers_output.append(x)
    return layernorm(x, params["lnf_g"], params["lnf_b"], eps=eps), layers_output


# ---------------------------------------------------------------------------
# Pure-JAX reference (mirrors the PyTorch forward, causal attention assumed)
# ---------------------------------------------------------------------------
def _mm(a, b):
    return jnp.dot(a, b, precision=jax.lax.Precision.HIGHEST)


def _ln_ref(x, g, b, eps):
    x = x.astype(jnp.float32)
    mean = jnp.mean(x, axis=-1, keepdims=True)
    var = jnp.mean((x - mean) ** 2, axis=-1, keepdims=True)
    return (x - mean) * jax.lax.rsqrt(var + eps) * g + b


def _reference_forward(input_ids, params, *, n_head, eps):
    S = input_ids.shape[0]
    x = params["wte"][input_ids] + params["wpe"][jnp.arange(S)]
    for lp in params["layers"]:
        h1 = _ln_ref(x, lp["ln1_g"], lp["ln1_b"], eps)
        qkv = _mm(h1, lp["w_qkv"]) + lp["b_qkv"]
        E = x.shape[1]
        dim = E // n_head
        causal = jnp.arange(S)[None, :] <= jnp.arange(S)[:, None]
        heads = []
        for h in range(n_head):
            q = qkv[:, h * dim:(h + 1) * dim]
            k = qkv[:, E + h * dim:E + (h + 1) * dim]
            v = qkv[:, 2 * E + h * dim:2 * E + (h + 1) * dim]
            s = _mm(q, k.T) / math.sqrt(dim)
            s = jnp.where(causal, s, -jnp.inf)
            heads.append(_mm(jax.nn.softmax(s, axis=-1), v))
        ctx = jnp.concatenate(heads, axis=-1)
        x = x + _mm(ctx, lp["w_out"]) + lp["b_out"]
        h2 = _ln_ref(x, lp["ln2_g"], lp["ln2_b"], eps)
        up = jax.nn.gelu(_mm(h2, lp["w_up"]) + lp["b_up"], approximate=True)
        x = x + _mm(up, lp["w_down"]) + lp["b_down"]
    return _ln_ref(x, params["lnf_g"], params["lnf_b"], eps)


# ---------------------------------------------------------------------------
if __name__ == "__main__":
    vocab_size, n_positions = 64, 16
    seq_len, n_embd, n_head, n_layer = 8, 32, 4, 2
    eps = 1e-5

    key = jax.random.PRNGKey(0)
    key, k_ids, k_wte, k_wpe = jax.random.split(key, 4)
    input_ids = jax.random.randint(k_ids, (seq_len,), 0, vocab_size)

    def normal(k, shape, scale=0.02):
        return scale * jax.random.normal(k, shape, dtype=jnp.float32)

    params = {
        "wte": normal(k_wte, (vocab_size, n_embd)),
        "wpe": normal(k_wpe, (n_positions, n_embd)),
        "layers": [],
    }
    for _ in range(n_layer):
        key, *ks = jax.random.split(key, 13)
        params["layers"].append({
            "ln1_g": 1.0 + normal(ks[0], (n_embd,)),
            "ln1_b": normal(ks[1], (n_embd,)),
            "w_qkv": normal(ks[2], (n_embd, 3 * n_embd)),
            "b_qkv": normal(ks[3], (3 * n_embd,)),
            "w_out": normal(ks[4], (n_embd, n_embd)),
            "b_out": normal(ks[5], (n_embd,)),
            "ln2_g": 1.0 + normal(ks[6], (n_embd,)),
            "ln2_b": normal(ks[7], (n_embd,)),
            "w_up": normal(ks[8], (n_embd, 4 * n_embd)),
            "b_up": normal(ks[9], (4 * n_embd,)),
            "w_down": normal(ks[10], (4 * n_embd, n_embd)),
            "b_down": normal(ks[11], (n_embd,)),
        })
    key, k_lg, k_lb = jax.random.split(key, 3)
    params["lnf_g"] = 1.0 + normal(k_lg, (n_embd,))
    params["lnf_b"] = normal(k_lb, (n_embd,))

    out, layers_output = gpt2_forward(input_ids, params, n_head=n_head, eps=eps)
    out = jax.block_until_ready(out)

    ref = _reference_forward(input_ids, params, n_head=n_head, eps=eps)
    assert out.shape == (seq_len, n_embd)
    assert len(layers_output) == n_layer + 1
    max_err = float(jnp.max(jnp.abs(out - ref)))
    assert jnp.allclose(out, ref, atol=1e-4, rtol=1e-4), f"mismatch, max_err={max_err}"

    print("KERNEL_OK")
</pallas_src>

<mosaic_0001>
module attributes {stable_mosaic.version = 11 : i64} {
  func.func @_ln_linear_kernel(%arg0: i32, %arg1: i32, %arg2: memref<8x32xf32, #tpu.memory_space<vmem>>, %arg3: memref<1x32xf32, #tpu.memory_space<vmem>>, %arg4: memref<1x32xf32, #tpu.memory_space<vmem>>, %arg5: memref<32x96xf32, #tpu.memory_space<vmem>>, %arg6: memref<1x96xf32, #tpu.memory_space<vmem>>, %arg7: memref<8x96xf32, #tpu.memory_space<vmem>>) attributes {dimension_semantics = [#tpu.dimension_semantics<parallel>, #tpu.dimension_semantics<parallel>], iteration_bounds = array<i64: 1, 1>, scalar_prefetch = 0 : i64, scratch_operands = 0 : i64, tpu.core_type = #tpu.core_type<tc>, window_params = [{transform_indices = @transform_0, window_bounds = array<i64: 8, 32>}, {pipeline_mode = #tpu.pipeline_mode<synchronous>, transform_indices = @transform_1, window_bounds = array<i64: 1, 32>}, {pipeline_mode = #tpu.pipeline_mode<synchronous>, transform_indices = @transform_2, window_bounds = array<i64: 1, 32>}, {transform_indices = @transform_3, window_bounds = array<i64: 32, 96>}, {transform_indices = @transform_4, window_bounds = array<i64: 1, 96>}, {transform_indices = @transform_5, window_bounds = array<i64: 8, 96>}]} {
    %c0 = arith.constant 0 : index
    %c0_0 = arith.constant 0 : index
    %0 = vector.load %arg2[%c0, %c0_0] : memref<8x32xf32, #tpu.memory_space<vmem>>, vector<8x32xf32>
    %cst = arith.constant dense<0.000000e+00> : vector<8xf32>
    %1 = vector.multi_reduction <add>, %0, %cst [1] : vector<8x32xf32> to vector<8xf32>
    %2 = vector.shape_cast %1 : vector<8xf32> to vector<8x1xf32>
    %cst_1 = arith.constant 3.200000e+01 : f32
    %3 = vector.broadcast %cst_1 : f32 to vector<8x1xf32>
    %4 = arith.divf %2, %3 : vector<8x1xf32>
    %5 = vector.broadcast %4 : vector<8x1xf32> to vector<8x32xf32>
    %6 = arith.subf %0, %5 : vector<8x32xf32>
    %7 = arith.mulf %6, %6 : vector<8x32xf32>
    %cst_2 = arith.constant dense<0.000000e+00> : vector<8xf32>
    %8 = vector.multi_reduction <add>, %7, %cst_2 [1] : vector<8x32xf32> to vector<8xf32>
    %9 = vector.shape_cast %8 : vector<8xf32> to vector<8x1xf32>
    %cst_3 = arith.constant 3.200000e+01 : f32
    %10 = vector.broadcast %cst_3 : f32 to vector<8x1xf32>
    %11 = arith.divf %9, %10 : vector<8x1xf32>
    %cst_4 = arith.constant 9.99999974E-6 : f32
    %12 = vector.broadcast %cst_4 : f32 to vector<8x1xf32>
    %13 = arith.addf %11, %12 : vector<8x1xf32>
    %14 = math.rsqrt %13 : vector<8x1xf32>
    %15 = vector.broadcast %14 : vector<8x1xf32> to vector<8x32xf32>
    %16 = arith.mulf %6, %15 : vector<8x32xf32>
    %c0_5 = arith.constant 0 : index
    %c0_6 = arith.constant 0 : index
    %17 = vector.load %arg3[%c0_5, %c0_6] : memref<1x32xf32, #tpu.memory_space<vmem>>, vector<1x32xf32>
    %18 = vector.broadcast %17 : vector<1x32xf32> to vector<8x32xf32>
    %19 = arith.mulf %16, %18 : vector<8x32xf32>
    %c0_7 = arith.constant 0 : index
    %c0_8 = arith.constant 0 : index
    %20 = vector.load %arg4[%c0_7, %c0_8] : memref<1x32xf32, #tpu.memory_space<vmem>>, vector<1x32xf32>
    %21 = vector.broadcast %20 : vector<1x32xf32> to vector<8x32xf32>
    %22 = arith.addf %19, %21 : vector<8x32xf32>
    %c0_9 = arith.constant 0 : index
    %c0_10 = arith.constant 0 : index
    %23 = vector.load %arg5[%c0_9, %c0_10] : memref<32x96xf32, #tpu.memory_space<vmem>>, vector<32x96xf32>
    %cst_11 = arith.constant dense<0.000000e+00> : vector<8x96xf32>
    %24 = tpu.matmul %22, %23, %cst_11 {dimension_numbers = #tpu.dot_dimension_numbers<[1], [0], [0], [1], [0, 0, 1, 1], [], []>} : vector<8x32xf32>, vector<32x96xf32>, vector<8x96xf32> -> vector<8x96xf32>
    %c0_12 = arith.constant 0 : index
    %c0_13 = arith.constant 0 : index
    %25 = vector.load %arg6[%c0_12, %c0_13] : memref<1x96xf32, #tpu.memory_space<vmem>>, vector<1x96xf32>
    %26 = vector.broadcast %25 : vector<1x96xf32> to vector<8x96xf32>
    %27 = arith.addf %24, %26 : vector<8x96xf32>
    %c0_14 = arith.constant 0 : index
    %c0_15 = arith.constant 0 : index
    %28 = vector.load %arg7[%c0_14, %c0_15] : memref<8x96xf32, #tpu.memory_space<vmem>>, vector<8x96xf32>
    tpu.vector_store %arg7[%c0_14, %c0_15], %27 {strides = array<i32>} : memref<8x96xf32, #tpu.memory_space<vmem>>, vector<8x96xf32>,
    return
  }
  func.func @transform_0(%arg0: i32, %arg1: i32) -> (i32, i32) {
    %c0_i32 = arith.constant 0 : i32
    %c0_i32_0 = arith.constant 0 : i32
    return %arg0, %c0_i32 : i32, i32
  }
  func.func @transform_1(%arg0: i32, %arg1: i32) -> (i32, i32) {
    %c0_i32 = arith.constant 0 : i32
    %c0_i32_0 = arith.constant 0 : i32
    %c0_i32_1 = arith.constant 0 : i32
    return %c0_i32, %c0_i32_0 : i32, i32
  }
  func.func @transform_2(%arg0: i32, %arg1: i32) -> (i32, i32) {
    %c0_i32 = arith.constant 0 : i32
    %c0_i32_0 = arith.constant 0 : i32
    %c0_i32_1 = arith.constant 0 : i32
    return %c0_i32, %c0_i32_0 : i32, i32
  }
  func.func @transform_3(%arg0: i32, %arg1: i32) -> (i32, i32) {
    %c0_i32 = arith.constant 0 : i32
    %c0_i32_0 = arith.constant 0 : i32
    return %c0_i32, %arg1 : i32, i32
  }
  func.func @transform_4(%arg0: i32, %arg1: i32) -> (i32, i32) {
    %c0_i32 = arith.constant 0 : i32
    %c0_i32_0 = arith.constant 0 : i32
    return %c0_i32, %arg1 : i32, i32
  }
  func.func @transform_5(%arg0: i32, %arg1: i32) -> (i32, i32) {
    %c0_i32 = arith.constant 0 : i32
    return %arg0, %arg1 : i32, i32
  }
}

</mosaic_0001>

<llo_original>
// kernel: tpu_custom_call.1
$region0: #{tpu_custom_call.1}
  #allocation0 [shape = 'u32[]', space=smem, size = 0x4, offset = 0x4, fixed_abs, tag = 'smem constant byte address 0x4 - core index']
  #allocation1 [shape = 'u32[144,128]{1,0:T(1,128)}', space=vmem, size = 0x12000, scoped, tag = 'internal scratch']
  %s0 = inlined_call_operand.hbm [shape: f32[8,32], index: 0, kind: input, shape index: {}]
  %s1 = inlined_call_operand.hbm [shape: f32[1,32], index: 1, kind: input, shape index: {}]
  %s2 = inlined_call_operand.hbm [shape: f32[1,32], index: 2, kind: input, shape index: {}]
  %s3 = inlined_call_operand.hbm [shape: f32[32,96], index: 3, kind: input, shape index: {}]
  %s4 = inlined_call_operand.hbm [shape: f32[1,96], index: 4, kind: input, shape index: {}]
  %s5 = inlined_call_operand.hbm [shape: f32[8,96], index: 5, kind: output, shape index: {}]
  %s6 = sld [smem:[#allocation0]]
  $region50: #{tpu_custom_call.1} parent=0
    _
  %s8 = ssub.s32 1, %s6
  %s9 = scalar_select 0, %s8, %s6
  $region1: #{tpu_custom_call.1} parent=0
    #allocation2 [shape = 'u8[4096]{0}', space=vmem, size = 0x1000, scoped, tag = 'input window, operand 0, single buffered']
    #allocation3 [shape = 's32[1]{0}', space=sflag, size = 0x4, scoped, tag = 'scoped memory for tpu_custom_call.1']
    #allocation4 [shape = 's32[1]{0}', space=sflag, size = 0x4, scoped, tag = 'scoped memory for tpu_custom_call.1']
    #allocation5 [shape = 'u8[512]{0}', space=vmem, size = 0x400, scoped, tag = 'input window, operand 1, single buffered']
    #allocation6 [shape = 's32[1]{0}', space=sflag, size = 0x4, scoped, tag = 'scoped memory for tpu_custom_call.1']
    #allocation7 [shape = 'u8[512]{0}', space=vmem, size = 0x400, scoped, tag = 'input window, operand 2, single buffered']
    #allocation8 [shape = 'u8[16384]{0}', space=vmem, size = 0x4000, scoped, tag = 'input window, operand 3, single buffered']
    #allocation9 [shape = 's32[1]{0}', space=sflag, size = 0x4, scoped, tag = 'scoped memory for tpu_custom_call.1']
    #allocation10 [shape = 'u8[512]{0}', space=vmem, size = 0x400, scoped, tag = 'input window, operand 4, single buffered']
    #allocation11 [shape = 'u8[4096]{0}', space=vmem, size = 0x1000, scoped, tag = 'output window, operand 0, single buffered']
    %10 = vsyncpa [#allocation3], 0
    %11 = vsyncpa [#allocation6], 0
    %12 = vsyncpa [#allocation9], 0
    %13 = vsyncpa [#allocation4], 0
    // Predicated region
    $region2: #{tpu_custom_call.1} parent=1 // pred_check
      _
    $region3: #{tpu_custom_call.1} parent=1 // pred_check_branch
      %15 = sbr.rel (0) target = $region5
    $region4: #{tpu_custom_call.1} parent=1 // pred_region
      %s17 = ssub.s32 128, 128
      %18 = vsyncadd [#allocation3], %s17
      %s20 = sshll.u32 [#allocation2], 4
      %s21 = int_to_ptr.vmem [resolvable:$true] %s20
      %23 = dma.hbm_to_vmem [thread:$0]  %s0, 128, %s21, [#allocation3]
    $region5: #{tpu_custom_call.1} parent=1 // pred_fallthru
      _
    // Predicated region
    $region6: #{tpu_custom_call.1} parent=1 // pred_check
      _
    $region7: #{tpu_custom_call.1} parent=1 // pred_check_branch
      %25 = sbr.rel (0) target = $region9
    $region8: #{tpu_custom_call.1} parent=1 // pred_region
      %s27 = ssub.s32 16, 16
      %28 = vsyncadd [#allocation6], %s27
      %s30 = sshll.u32 [#allocation5], 4
      %s31 = int_to_ptr.vmem [resolvable:$true] %s30
      %33 = dma.hbm_to_vmem [thread:$0]  %s1, 16, %s31, [#allocation6]
    $region9: #{tpu_custom_call.1} parent=1 // pred_fallthru
      _
    // Predicated region
    $region10: #{tpu_custom_call.1} parent=1 // pred_check
      _
    $region11: #{tpu_custom_call.1} parent=1 // pred_check_branch
      %35 = sbr.rel (0) target = $region13
    $region12: #{tpu_custom_call.1} parent=1 // pred_region
      %s37 = ssub.s32 16, 16
      %38 = vsyncadd [#allocation6], %s37
      %s40 = sshll.u32 [#allocation7], 4
      %s41 = int_to_ptr.vmem [resolvable:$true] %s40
      %43 = dma.hbm_to_vmem [thread:$0]  %s2, 16, %s41, [#allocation6]
    $region13: #{tpu_custom_call.1} parent=1 // pred_fallthru
      _
    // Predicated region
    $region14: #{tpu_custom_call.1} parent=1 // pred_check
      _
    $region15: #{tpu_custom_call.1} parent=1 // pred_check_branch
      %45 = sbr.rel (0) target = $region17
    $region16: #{tpu_custom_call.1} parent=1 // pred_region
      %s47 = ssub.s32 512, 512
      %48 = vsyncadd [#allocation9], %s47
      %s49 = sshll.u32 [#allocation8], 4
      %s50 = int_to_ptr.vmem [resolvable:$true] %s49
      %55 = dma.hbm_to_vmem [thread:$0]  %s3, 512, %s50, [#allocation9], 128, 128, 8
    $region17: #{tpu_custom_call.1} parent=1 // pred_fallthru
      _
    // Predicated region
    $region18: #{tpu_custom_call.1} parent=1 // pred_check
      _
    $region19: #{tpu_custom_call.1} parent=1 // pred_check_branch
      %57 = sbr.rel (0) target = $region21
    $region20: #{tpu_custom_call.1} parent=1 // pred_region
      %s59 = ssub.s32 16, 16
      %60 = vsyncadd [#allocation9], %s59
      %s62 = sshll.u32 [#allocation10], 4
      %s63 = int_to_ptr.vmem [resolvable:$true] %s62
      %65 = dma.hbm_to_vmem [thread:$0]  %s4, 16, %s63, [#allocation9]
    $region21: #{tpu_custom_call.1} parent=1 // pred_fallthru
      _
    // Predicated region
    $region22: #{tpu_custom_call.1} parent=1 // pred_check
      _
    $region23: #{tpu_custom_call.1} parent=1 // pred_check_branch
      %67 = sbr.rel (0) target = $region25
    $region24: #{tpu_custom_call.1} parent=1 // pred_region
      %68 = dma.done [#allocation3], 128
    $region25: #{tpu_custom_call.1} parent=1 // pred_fallthru
      _
    // Predicated region
    $region26: #{tpu_custom_call.1} parent=1 // pred_check
      _
    $region27: #{tpu_custom_call.1} parent=1 // pred_check_branch
      %70 = sbr.rel (0) target = $region29
    $region28: #{tpu_custom_call.1} parent=1 // pred_region
      %71 = dma.done [#allocation6], 16
    $region29: #{tpu_custom_call.1} parent=1 // pred_fallthru
      _
    // Predicated region
    $region30: #{tpu_custom_call.1} parent=1 // pred_check
      _
    $region31: #{tpu_custom_call.1} parent=1 // pred_check_branch
      %73 = sbr.rel (0) target = $region33
    $region32: #{tpu_custom_call.1} parent=1 // pred_region
      %74 = dma.done [#allocation6], 16
    $region33: #{tpu_custom_call.1} parent=1 // pred_fallthru
      _
    // Predicated region
    $region34: #{tpu_custom_call.1} parent=1 // pred_check
      _
    $region35: #{tpu_custom_call.1} parent=1 // pred_check_branch
      %76 = sbr.rel (0) target = $region37
    $region36: #{tpu_custom_call.1} parent=1 // pred_region
      %77 = dma.done [#allocation9], 512
    $region37: #{tpu_custom_call.1} parent=1 // pred_fallthru
      _
    // Predicated region
    $region38: #{tpu_custom_call.1} parent=1 // pred_check
      _
    $region39: #{tpu_custom_call.1} parent=1 // pred_check_branch
      %79 = sbr.rel (0) target = $region41
    $region40: #{tpu_custom_call.1} parent=1 // pred_region
      %80 = dma.done [#allocation9], 16
    $region41: #{tpu_custom_call.1} parent=1 // pred_fallthru
      _
    %v81 = vld [vmem:[#allocation2] sm:$0xff]
    %vm82 = vcmask 261120
    %v83 = vsel %vm82, %v81, 0.0
    %84 = vadd.xlane.f32.xlu0 %v83
    %v85 = vpop.xlane.xlu0 %84
    %v86 = vrcp.pop 32.0
    %v87 = vmul.f32 %v85, %v86
    %v88 = vsub.f32 %v81, %v87
    %v89 = vmul.f32 %v88, %v88
    %v90 = vsel %vm82, %v89, 0.0
    %91 = vadd.xlane.f32.xlu0 %v90
    %v92 = vpop.xlane.xlu0 %91
    %v93 = vmul.f32 %v92, %v86
    %v94 = vadd.f32 %v93, 1e-05
    %v95 = vrsqrt.pop %v94
    %v96 = vmul.f32 %v88, %v95
    %v97 = vld [vmem:[#allocation5] sm:$0x1]
    %v99 = vlaneseq
    %v100 = vshrl.u32 %v99, 7
    %v101 = vsub.s32 0, %v100
    %v102 = vrot.slane %v97, %v101
    %v104 = vmul.f32 %v96, %v102
    %v105 = vld [vmem:[#allocation7] sm:$0x1]
    %v107 = vlaneseq
    %v108 = vshrl.u32 %v107, 7
    %v109 = vsub.s32 0, %v108
    %v110 = vrot.slane %v105, %v109
    %v112 = vadd.f32 %v104, %v110
    %v113 = vld [vmem:[#allocation8] sm:$0xff]
    %v114 = vld [vmem:[#allocation8 + $0x8] sm:$0xff]
    %v115 = vld [vmem:[#allocation8 + $0x10] sm:$0xff]
    %v116 = vld [vmem:[#allocation8 + $0x18] sm:$0xff]
    %v117 = vld [vmem:[#allocation10] sm:$0x1]
    %v119 = vlaneseq
    %v120 = vshrl.u32 %v119, 7
    %v121 = vsub.s32 0, %v120
    %v122 = vrot.slane %v117, %v121
    %v125 = vsel %vm82, %v112, 0
    %127 = vmatprep.subr.mxu0 0.0
    %128 = vmatpush1.msra.mxu0 %v113
    %129 = vmatprep.subr.mxu0 0.0
    %130 = vmatpush1.msra.mxu0 %v114
    %131 = vmatprep.subr.mxu0 0.0
    %132 = vmatpush1.msra.mxu0 %v115
    %133 = vmatprep.subr.mxu0 0.0
    %134 = vmatpush1.msra.mxu0 %v116
    %135 = vmatprep.subr.mxu0 0.0
    %136 = vmatpush1.msra.mxu0 0.0
    %137 = vmatprep.subr.mxu0 0.0
    %138 = vmatpush1.msra.mxu0 0.0
    %139 = vmatprep.subr.mxu0 0.0
    %140 = vmatpush1.msra.mxu0 0.0
    %141 = vmatprep.subr.mxu0 0.0
    %142 = vmatpush1.msra.mxu0 0.0
    %143 = vmatprep.subr.mxu0 0.0
    %144 = vmatpush1.msra.mxu0 0.0
    %145 = vmatprep.subr.mxu0 0.0
    %146 = vmatpush1.msra.mxu0 0.0
    %147 = vmatprep.subr.mxu0 0.0
    %148 = vmatpush1.msra.mxu0 0.0
    %149 = vmatprep.subr.mxu0 0.0
    %150 = vmatpush1.msra.mxu0 0.0
    %151 = vmatprep.subr.mxu0 0.0
    %152 = vmatpush1.msra.mxu0 0.0
    %153 = vmatprep.subr.mxu0 0.0
    %154 = vmatpush1.msra.mxu0 0.0
    %155 = vmatprep.subr.mxu0 0.0
    %156 = vmatpush1.msra.mxu0 0.0
    %157 = vmatprep.subr.mxu0 0.0
    %158 = vmatpush1.msra.mxu0 0.0
    %159 = vmatprep.subr.mxu0 0.0
    %160 = vmatpush1.msra.mxu0 0.0
    %161 = vmatprep.subr.mxu0 0.0
    %162 = vmatpush1.msra.mxu0 0.0
    %163 = vmatprep.subr.mxu0 0.0
    %164 = vmatpush1.msra.mxu0 0.0
    %165 = vmatprep.subr.mxu0 0.0
    %166 = vmatpush1.msra.mxu0 0.0
    %167 = vmatprep.subr.mxu0 0.0
    %168 = vmatpush1.msra.mxu0 0.0
    %169 = vmatprep.subr.mxu0 0.0
    %170 = vmatpush1.msra.mxu0 0.0
    %171 = vmatprep.subr.mxu0 0.0
    %172 = vmatpush1.msra.mxu0 0.0
    %173 = vmatprep.subr.mxu0 0.0
    %174 = vmatpush1.msra.mxu0 0.0
    %175 = vmatprep.subr.mxu0 0.0
    %176 = vmatpush1.msra.mxu0 0.0
    %177 = vmatprep.subr.mxu0 0.0
    %178 = vmatpush1.msra.mxu0 0.0
    %179 = vmatprep.subr.mxu0 0.0
    %180 = vmatpush1.msra.mxu0 0.0
    %181 = vmatprep.subr.mxu0 0.0
    %182 = vmatpush1.msra.mxu0 0.0
    %183 = vmatprep.subr.mxu0 0.0
    %184 = vmatpush1.msra.mxu0 0.0
    %185 = vmatprep.subr.mxu0 0.0
    %186 = vmatpush1.msra.mxu0 0.0
    %187 = vmatprep.subr.mxu0 0.0
    %188 = vmatpush1.msra.mxu0 0.0
    %189 = vmatprep.subr.mxu0 0.0
    %190 = vmatpush1.msra.mxu0 0.0
    %191 = vmatprep.mubr.f32.mxu0 0.0
    %192 = vmatmul.mubr.f32.gmra.mrb[0].mxu0 %v125
    %v193 = vpop.f32.mrb[0].mxu0
    %v194 = vadd.f32 %v122, %v193
    %v195 = vpop.f32.mrb[0].mxu0
    %196 = vdwg.mxu0
    %vm197 = vcmask 785408
    %198 = vst.msk [vmem:[#allocation11] sm:$0xff] %vm197, %v194
    // Predicated region
    $region42: #{tpu_custom_call.1} parent=1 // pred_check
      _
    $region43: #{tpu_custom_call.1} parent=1 // pred_check_branch
      %200 = sbr.rel (0) target = $region45
    $region44: #{tpu_custom_call.1} parent=1 // pred_region
      %s202 = ssub.s32 128, 128
      %203 = vsyncadd [#allocation4], %s202
      %s205 = sshll.u32 [#allocation11], 4
      %s206 = int_to_ptr.vmem [resolvable:$true] %s205
      %208 = dma.vmem_to_hbm [thread:$0]  %s206, 128, %s5, [#allocation4]
    $region45: #{tpu_custom_call.1} parent=1 // pred_fallthru
      _
    // Predicated region
    $region46: #{tpu_custom_call.1} parent=1 // pred_check
      _
    $region47: #{tpu_custom_call.1} parent=1 // pred_check_branch
      %210 = sbr.rel (0) target = $region49
    $region48: #{tpu_custom_call.1} parent=1 // pred_region
      %211 = dma.done [#allocation4], 128
    $region49: #{tpu_custom_call.1} parent=1 // pred_fallthru
      _
    %212 = vsyncpa [#allocation3], 1
    %213 = vsyncpa [#allocation6], 1
    %214 = vsyncpa [#allocation9], 1
    %215 = vsyncpa [#allocation4], 1

</llo_original>
